<compile_context>
chip_gen: v6e
topology: v6e:2x2x1
jax: 0.10.0
libtpu: 0.0.40
codegen_flags: <defaults>
</compile_context>

<pallas_src>
import functools

import jax
import jax.numpy as jnp
from jax.experimental import pallas as pl
from jax.experimental.pallas import tpu as pltpu


def _ca_fused_kernel(x_ref, w1_ref, b1_ref, w2t_ref, b2_ref, o_ref, *, inv_hw):
    # x_ref : (nb, C, HW)   w1_ref : (Cr, C)   b1_ref: (1, Cr)
    # w2t_ref: (Cr, C)      b2_ref : (1, C)    o_ref : (nb, C, HW)

    # AdaptiveAvgPool2d(1): f32 accumulation, divide by the true H*W.
    pooled = jnp.sum(x_ref[...].astype(jnp.float32), axis=-1) * inv_hw    # (nb, C)

    # 1x1 conv #1 + ReLU: lane-dense multiply + lane reduce over C.
    h = jnp.sum(pooled[:, None, :] * w1_ref[...][None, :, :], axis=-1)    # (nb, Cr)
    h = jnp.maximum(h + b1_ref[...], 0.0)

    # 1x1 conv #2 + Sigmoid: lane-dense multiply + sublane reduce over Cr.
    y = jnp.sum(h[:, :, None] * w2t_ref[...][None, :, :], axis=1)         # (nb, C)
    gate = jax.nn.sigmoid(y + b2_ref[...])                                # (nb, C)

    # Scale: re-read x in native dtype; gate cast once, broadcast over HW.
    g = gate.astype(x_ref.dtype)[:, :, None]                              # (nb, C, 1)
    o_ref[...] = (x_ref[...] * g).astype(o_ref.dtype)


def _ca_scale_kernel(x_ref, g_ref, o_ref):
    # x_ref: (1, C, hw_blk)   g_ref: (1, C, 1) f32   o_ref: (1, C, hw_blk)
    o_ref[...] = (x_ref[...] * g_ref[...].astype(x_ref.dtype)).astype(o_ref.dtype)


def ca_layer(x_nchw, w1, b1, w2, b2, *, block_bytes_cap=2 * 1024 * 1024):
    """Channel attention.  x: (N,C,H,W); w1:(Cr,C) b1:(Cr,) w2:(C,Cr) b2:(C,)."""
    N, C, H, W = x_nchw.shape
    Cr = w1.shape[0]
    HW = H * W
    elem = jnp.dtype(x_nchw.dtype).itemsize

    x3 = x_nchw.reshape(N, C, HW)                          # metadata-only reshape
    w1f = jnp.asarray(w1, jnp.float32).reshape(Cr, C)      # (Cr, C)  C on lanes
    w2t = jnp.asarray(w2, jnp.float32).reshape(C, Cr).T    # (Cr, C)  C on lanes
    b1r = jnp.asarray(b1, jnp.float32).reshape(1, Cr)
    b2r = jnp.asarray(b2, jnp.float32).reshape(1, C)

    per_img = C * HW * elem

    if per_img <= block_bytes_cap:
        # ---- fused single-pass path -------------------------------------
        # nb: divisor of N (no batch pad), block <= cap, and >=4 grid steps
        # when N allows (pipeline overlap per core; feeds both v7x TCs).
        nb_vmem = max(1, block_bytes_cap // per_img)
        target_steps = min(4, N)
        nb_steps = max(1, N // target_steps)
        nb_max = max(1, min(nb_vmem, nb_steps, N))
        nb = max(d for d in range(1, nb_max + 1) if N % d == 0)
        grid = (N // nb,)

        cost = pl.CostEstimate(
            flops=int(2 * N * C * HW + 4 * N * C * Cr),
            transcendentals=int(N * C),
            bytes_accessed=int(2 * N * C * HW * elem + 4 * (2 * C * Cr + C + Cr)),
        )

        out = pl.pallas_call(
            functools.partial(_ca_fused_kernel, inv_hw=1.0 / float(HW)),
            out_shape=jax.ShapeDtypeStruct((N, C, HW), x3.dtype),
            grid_spec=pltpu.PrefetchScalarGridSpec(
                num_scalar_prefetch=0,
                grid=grid,
                in_specs=[
                    pl.BlockSpec((nb, C, HW), lambda n: (n, 0, 0)),   # x slab
                    pl.BlockSpec((Cr, C), lambda n: (0, 0)),          # w1
                    pl.BlockSpec((1, Cr), lambda n: (0, 0)),          # b1
                    pl.BlockSpec((Cr, C), lambda n: (0, 0)),          # w2^T
                    pl.BlockSpec((1, C), lambda n: (0, 0)),           # b2
                ],
                out_specs=pl.BlockSpec((nb, C, HW), lambda n: (n, 0, 0)),
            ),
            compiler_params=pltpu.CompilerParams(
                dimension_semantics=("parallel",),
                vmem_limit_bytes=32 * 1024 * 1024,
            ),
            cost_estimate=cost,
        )(x3, w1f, b1r, w2t, b2r)
        return out.reshape(N, C, H, W)

    # ---- split path: a single (C, HW) slab exceeds the block budget ------
    # Pooled mean + tiny gate in XLA (one read pass; C*N scalars of output),
    # then a Pallas scale kernel chunked over HW.  HW chunks are multiples of
    # 128; only the scale pass ever sees the ragged boundary block, so the
    # garbage there is discarded on store and never enters the pooled mean.
    pooled = jnp.mean(x3, axis=-1, dtype=jnp.float32)                 # (N, C)
    h = jnp.maximum(pooled @ w1f.T + b1r, 0.0)                        # (N, Cr)
    gate = jax.nn.sigmoid(h @ w2t + b2r).reshape(N, C, 1)             # (N, C, 1)

    hw_blk = (block_bytes_cap // (C * elem)) // 128 * 128
    if hw_blk < 128:
        hw_blk = 128
    hw_blk = min(hw_blk, HW)
    n_hw = pl.cdiv(HW, hw_blk)

    out = pl.pallas_call(
        _ca_scale_kernel,
        out_shape=jax.ShapeDtypeStruct((N, C, HW), x3.dtype),
        grid_spec=pltpu.PrefetchScalarGridSpec(
            num_scalar_prefetch=0,
            grid=(N, n_hw),
            in_specs=[
                pl.BlockSpec((1, C, hw_blk), lambda n, h_: (n, 0, h_)),
                pl.BlockSpec((1, C, 1), lambda n, h_: (n, 0, 0)),
            ],
            out_specs=pl.BlockSpec((1, C, hw_blk), lambda n, h_: (n, 0, h_)),
        ),
        compiler_params=pltpu.CompilerParams(
            dimension_semantics=("parallel", "parallel"),
            vmem_limit_bytes=32 * 1024 * 1024,
        ),
    )(x3, gate)
    return out.reshape(N, C, H, W)


def _reference(x, w1, b1, w2, b2):
    pooled = jnp.mean(x, axis=(2, 3), keepdims=True)                    # (N,C,1,1)
    h = jnp.einsum('rc,nchw->nrhw', w1, pooled) + b1[None, :, None, None]
    h = jnp.maximum(h, 0.0)
    y = jnp.einsum('cr,nrhw->nchw', w2, h) + b2[None, :, None, None]
    y = jax.nn.sigmoid(y)
    return x * y


def _run_case(key, N, C, H, W, reduction, **kwargs):
    Cr = C // reduction
    kx, k1, k2, k3, k4 = jax.random.split(key, 5)
    x = jax.random.normal(kx, (N, C, H, W), dtype=jnp.float32)
    w1 = jax.random.normal(k1, (Cr, C), dtype=jnp.float32) * 0.1
    b1 = jax.random.normal(k2, (Cr,), dtype=jnp.float32) * 0.1
    w2 = jax.random.normal(k3, (C, Cr), dtype=jnp.float32) * 0.1
    b2 = jax.random.normal(k4, (C,), dtype=jnp.float32) * 0.1

    out = ca_layer(x, w1, b1, w2, b2, **kwargs)
    jax.block_until_ready(out)

    ref = _reference(x, w1, b1, w2, b2)
    assert out.shape == (N, C, H, W)
    assert jnp.allclose(out, ref, atol=1e-5, rtol=1e-5), "mismatch vs reference"


if __name__ == "__main__":
    # num_feats=64, reduction=16 -> hidden channels = 4 (matches the 1x1 ConvBlocks)
    key = jax.random.PRNGKey(0)
    k_a, k_b, k_c, k_d = jax.random.split(key, 4)
    # nominal shapes (HW = 256, lane-aligned)
    _run_case(k_a, N=2, C=64, H=16, W=16, reduction=16)
    # ragged HW (100): exercises full-extent last block dim + masked stores
    _run_case(k_b, N=5, C=64, H=10, W=10, reduction=16)
    # nb > 1 (nb=2, 4 grid steps), no batch padding needed
    _run_case(k_c, N=8, C=64, H=8, W=8, reduction=16)
    # force the HW-split path (tiny block cap) incl. a ragged last HW chunk
    _run_case(k_d, N=3, C=64, H=24, W=24, reduction=16, block_bytes_cap=64 * 1024)
    print("KERNEL_OK")
</pallas_src>

<mosaic_0001>
module attributes {stable_mosaic.version = 11 : i64} {
  func.func @_ca_fused_kernel(%arg0: i32, %arg1: memref<1x64x256xf32, #tpu.memory_space<vmem>>, %arg2: memref<4x64xf32, #tpu.memory_space<vmem>>, %arg3: memref<1x4xf32, #tpu.memory_space<vmem>>, %arg4: memref<4x64xf32, #tpu.memory_space<vmem>>, %arg5: memref<1x64xf32, #tpu.memory_space<vmem>>, %arg6: memref<1x64x256xf32, #tpu.memory_space<vmem>>) attributes {dimension_semantics = [#tpu.dimension_semantics<parallel>], iteration_bounds = array<i64: 2>, scalar_prefetch = 0 : i64, scratch_operands = 0 : i64, tpu.core_type = #tpu.core_type<tc>, window_params = [{transform_indices = @transform_0, window_bounds = array<i64: 1, 64, 256>}, {pipeline_mode = #tpu.pipeline_mode<synchronous>, transform_indices = @transform_1, window_bounds = array<i64: 4, 64>}, {pipeline_mode = #tpu.pipeline_mode<synchronous>, transform_indices = @transform_2, window_bounds = array<i64: 1, 4>}, {pipeline_mode = #tpu.pipeline_mode<synchronous>, transform_indices = @transform_3, window_bounds = array<i64: 4, 64>}, {pipeline_mode = #tpu.pipeline_mode<synchronous>, transform_indices = @transform_4, window_bounds = array<i64: 1, 64>}, {transform_indices = @transform_5, window_bounds = array<i64: 1, 64, 256>}]} {
    %c0 = arith.constant 0 : index
    %c0_0 = arith.constant 0 : index
    %c0_1 = arith.constant 0 : index
    %0 = vector.load %arg1[%c0, %c0_0, %c0_1] : memref<1x64x256xf32, #tpu.memory_space<vmem>>, vector<1x64x256xf32>
    %cst = arith.constant dense<0.000000e+00> : vector<1x64xf32>
    %1 = vector.multi_reduction <add>, %0, %cst [2] : vector<1x64x256xf32> to vector<1x64xf32>
    %cst_2 = arith.constant 3.906250e-03 : f32
    %2 = vector.broadcast %cst_2 : f32 to vector<1x64xf32>
    %3 = arith.mulf %1, %2 : vector<1x64xf32>
    %4 = vector.shape_cast %3 : vector<1x64xf32> to vector<1x1x64xf32>
    %c0_3 = arith.constant 0 : index
    %c0_4 = arith.constant 0 : index
    %5 = vector.load %arg2[%c0_3, %c0_4] : memref<4x64xf32, #tpu.memory_space<vmem>>, vector<4x64xf32>
    %6 = vector.shape_cast %5 : vector<4x64xf32> to vector<1x4x64xf32>
    %7 = vector.broadcast %4 : vector<1x1x64xf32> to vector<1x4x64xf32>
    %8 = arith.mulf %7, %6 : vector<1x4x64xf32>
    %cst_5 = arith.constant dense<0.000000e+00> : vector<1x4xf32>
    %9 = vector.multi_reduction <add>, %8, %cst_5 [2] : vector<1x4x64xf32> to vector<1x4xf32>
    %c0_6 = arith.constant 0 : index
    %c0_7 = arith.constant 0 : index
    %10 = vector.load %arg3[%c0_6, %c0_7] : memref<1x4xf32, #tpu.memory_space<vmem>>, vector<1x4xf32>
    %11 = arith.addf %9, %10 : vector<1x4xf32>
    %cst_8 = arith.constant 0.000000e+00 : f32
    %12 = vector.broadcast %cst_8 : f32 to vector<1x4xf32>
    %13 = arith.maximumf %11, %12 : vector<1x4xf32>
    %14 = vector.shape_cast %13 : vector<1x4xf32> to vector<1x4x1xf32>
    %c0_9 = arith.constant 0 : index
    %c0_10 = arith.constant 0 : index
    %15 = vector.load %arg4[%c0_9, %c0_10] : memref<4x64xf32, #tpu.memory_space<vmem>>, vector<4x64xf32>
    %16 = vector.shape_cast %15 : vector<4x64xf32> to vector<1x4x64xf32>
    %17 = vector.broadcast %14 : vector<1x4x1xf32> to vector<1x4x64xf32>
    %18 = arith.mulf %17, %16 : vector<1x4x64xf32>
    %cst_11 = arith.constant dense<0.000000e+00> : vector<1x64xf32>
    %19 = vector.multi_reduction <add>, %18, %cst_11 [1] : vector<1x4x64xf32> to vector<1x64xf32>
    %c0_12 = arith.constant 0 : index
    %c0_13 = arith.constant 0 : index
    %20 = vector.load %arg5[%c0_12, %c0_13] : memref<1x64xf32, #tpu.memory_space<vmem>>, vector<1x64xf32>
    %21 = arith.addf %19, %20 : vector<1x64xf32>
    %22 = arith.negf %21 : vector<1x64xf32>
    %23 = math.exp %22 : vector<1x64xf32>
    %cst_14 = arith.constant 1.000000e+00 : f32
    %24 = vector.broadcast %cst_14 : f32 to vector<1x64xf32>
    %25 = arith.addf %24, %23 : vector<1x64xf32>
    %26 = arith.divf %24, %25 : vector<1x64xf32>
    %27 = vector.shape_cast %26 : vector<1x64xf32> to vector<1x64x1xf32>
    %c0_15 = arith.constant 0 : index
    %c0_16 = arith.constant 0 : index
    %c0_17 = arith.constant 0 : index
    %28 = vector.load %arg1[%c0_15, %c0_16, %c0_17] : memref<1x64x256xf32, #tpu.memory_space<vmem>>, vector<1x64x256xf32>
    %29 = vector.broadcast %27 : vector<1x64x1xf32> to vector<1x64x256xf32>
    %30 = arith.mulf %28, %29 : vector<1x64x256xf32>
    %c0_18 = arith.constant 0 : index
    %c0_19 = arith.constant 0 : index
    %c0_20 = arith.constant 0 : index
    %31 = vector.load %arg6[%c0_18, %c0_19, %c0_20] : memref<1x64x256xf32, #tpu.memory_space<vmem>>, vector<1x64x256xf32>
    tpu.vector_store %arg6[%c0_18, %c0_19, %c0_20], %30 {strides = array<i32>} : memref<1x64x256xf32, #tpu.memory_space<vmem>>, vector<1x64x256xf32>,
    return
  }
  func.func @transform_0(%arg0: i32) -> (i32, i32, i32) {
    %c0_i32 = arith.constant 0 : i32
    %c0_i32_0 = arith.constant 0 : i32
    %c0_i32_1 = arith.constant 0 : i32
    return %arg0, %c0_i32, %c0_i32_0 : i32, i32, i32
  }
  func.func @transform_1(%arg0: i32) -> (i32, i32) {
    %c0_i32 = arith.constant 0 : i32
    %c0_i32_0 = arith.constant 0 : i32
    %c0_i32_1 = arith.constant 0 : i32
    return %c0_i32, %c0_i32_0 : i32, i32
  }
  func.func @transform_2(%arg0: i32) -> (i32, i32) {
    %c0_i32 = arith.constant 0 : i32
    %c0_i32_0 = arith.constant 0 : i32
    %c0_i32_1 = arith.constant 0 : i32
    return %c0_i32, %c0_i32_0 : i32, i32
  }
  func.func @transform_3(%arg0: i32) -> (i32, i32) {
    %c0_i32 = arith.constant 0 : i32
    %c0_i32_0 = arith.constant 0 : i32
    %c0_i32_1 = arith.constant 0 : i32
    return %c0_i32, %c0_i32_0 : i32, i32
  }
  func.func @transform_4(%arg0: i32) -> (i32, i32) {
    %c0_i32 = arith.constant 0 : i32
    %c0_i32_0 = arith.constant 0 : i32
    %c0_i32_1 = arith.constant 0 : i32
    return %c0_i32, %c0_i32_0 : i32, i32
  }
  func.func @transform_5(%arg0: i32) -> (i32, i32, i32) {
    %c0_i32 = arith.constant 0 : i32
    %c0_i32_0 = arith.constant 0 : i32
    %c0_i32_1 = arith.constant 0 : i32
    return %arg0, %c0_i32, %c0_i32_0 : i32, i32, i32
  }
}

</mosaic_0001>

<llo_original>
// kernel: tpu_custom_call.1
$region0: #{tpu_custom_call.1}
  #allocation0 [shape = 'u32[]', space=smem, size = 0x4, offset = 0x4, fixed_abs, tag = 'smem constant byte address 0x4 - core index']
  #allocation1 [shape = 'u32[144,128]{1,0:T(1,128)}', space=vmem, size = 0x12000, scoped, tag = 'internal scratch']
  %s0 = inlined_call_operand.hbm [shape: f32[2,64,256], index: 0, kind: input, shape index: {}]
  %s1 = inlined_call_operand.hbm [shape: f32[4,64], index: 1, kind: input, shape index: {}]
  %s2 = inlined_call_operand.vmem [shape: f32[1,4], index: 2, kind: input, shape index: {}]
  %s3 = inlined_call_operand.vmem [shape: f32[4,64], index: 3, kind: input, shape index: {}]
  %s4 = inlined_call_operand.vmem [shape: f32[1,64], index: 4, kind: input, shape index: {}]
  %s5 = inlined_call_operand.hbm [shape: f32[2,64,256], index: 5, kind: output, shape index: {}]
  %s6 = sld [smem:[#allocation0]]
  $region61: #{tpu_custom_call.1} parent=0
    _
  %s8 = ssub.s32 1, %s6
  %s9 = scalar_select 0, %s8, %s6
  $region1: #{tpu_custom_call.1} parent=0
    #allocation2 [shape = 'u8[131072]{0}', space=vmem, size = 0x20000, scoped, tag = 'input window, operand 0']
    #allocation3 [shape = 's32[2]{0}', space=sflag, size = 0x8, scoped, tag = 'scoped memory for tpu_custom_call.1']
    #allocation4 [shape = 's32[2]{0}', space=sflag, size = 0x8, scoped, tag = 'scoped memory for tpu_custom_call.1']
    #allocation5 [shape = 'u8[2048]{0}', space=vmem, size = 0x800, scoped, tag = 'input window, operand 1, single buffered']
    #allocation6 [shape = 's32[1]{0}', space=sflag, size = 0x4, scoped, tag = 'scoped memory for tpu_custom_call.1']
    #allocation7 [shape = 'u8[131072]{0}', space=vmem, size = 0x20000, scoped, tag = 'output window, operand 0']
    %10 = vsyncpa [#allocation3], 0
    %s11 = scalar_lea.sflag [#allocation3], 1
    %12 = vsyncpa %s11, 0
    %13 = vsyncpa [#allocation6], 0
    %14 = vsyncpa [#allocation4], 0
    %s15 = scalar_lea.sflag [#allocation4], 1
    %16 = vsyncpa %s15, 0
    loop: start=0, step=1, limit=4
    $region2: #{tpu_custom_call.1} parent=1 // loop_pre_header
      _
    $region3: #{tpu_custom_call.1} parent=1 // loop_header
      %s18 = sphi 0, %s22
      %p19 = scmp.ge.s32.totalorder %s18, 4
      %s28 = sphi 0, %s30
      %s31 = sphi 0, %s28
      %s32 = sphi 0, %s31
      %s48 = sphi 0, %s32
      %s52 = sphi 0, %s52
      %s54 = sphi 0, %s52
      %s55 = sphi 0, %s54
      %s69 = sphi 0, %s55
      %s73 = sphi 0, %s73
      %s75 = sphi 0, %s73
      %s76 = sphi 0, %s75
      %s90 = sphi 0, %s76
      %s94 = sphi 0, %s94
      %s96 = sphi 0, %s94
      %s97 = sphi 0, %s96
      %s111 = sphi 0, %s97
      %s115 = sphi 0, %s115
      %s117 = sphi 0, %s115
      %s118 = sphi 0, %s117
      %s132 = sphi 0, %s118
      %s138 = sphi 0, %s140
      %s141 = sphi 0, %s138
      %s142 = sphi 0, %s141
      %s158 = sphi 0, %s142
    $region4: #{tpu_custom_call.1} parent=1 // loop_header_branch
      %21 = sbr.rel (%p19) target = $region8
    $region5: #{tpu_custom_call.1} parent=1 // loop_body
      %s23 = ssub.s32 %s18, 1
      %s24 = ssub.s32 %s18, 2
      %s25 = sadd.s32 %s18, 1
      %s26 = ssub.s32 %s18, %s25
      %p27 = scmp.eq.s32.totalorder %s26, 0
      %s29 = sadd.s32 %s28, 1
      %s30 = scalar_select %p27, %s28, %s29
      %p33 = pneg %p27
      %p34 = scmp.eq.s32.totalorder %s18, 1
      %p35 = por %p33, %p34
      %p36 = scmp.ne.s32.totalorder %s28, %s31
      %p37 = scmp.eq.s32.totalorder %s18, 0
      %p38 = por %p36, %p37
      %p39 = scmp.ne.s32.totalorder %s28, %s31
      %p40 = scmp.eq.s32.totalorder %s23, 1
      %p41 = por %p39, %p40
      %p42 = scmp.ne.s32.totalorder %s31, %s32
      %p43 = scmp.eq.s32.totalorder %s23, 0
      %p44 = por %p42, %p43
      %p45 = scmp.ne.s32.totalorder %s31, %s32
      %p46 = scmp.eq.s32.totalorder %s24, 1
      %p47 = por %p45, %p46
      %p49 = scmp.ne.s32.totalorder %s32, %s48
      %p50 = scmp.eq.s32.totalorder %s24, 0
      %p51 = por %p49, %p50
      %s53 = sadd.s32 %s52, 1
      %p56 = scmp.eq.s32.totalorder %s18, 1
      %p57 = scmp.ne.s32.totalorder %s52, %s54
      %p58 = scmp.eq.s32.totalorder %s18, 0
      %p59 = por %p57, %p58
      %p60 = scmp.ne.s32.totalorder %s52, %s54
      %p61 = scmp.eq.s32.totalorder %s23, 1
      %p62 = por %p60, %p61
      %p63 = scmp.ne.s32.totalorder %s54, %s55
      %p64 = scmp.eq.s32.totalorder %s23, 0
      %p65 = por %p63, %p64
      %p66 = scmp.ne.s32.totalorder %s54, %s55
      %p67 = scmp.eq.s32.totalorder %s24, 1
      %p68 = por %p66, %p67
      %p70 = scmp.ne.s32.totalorder %s55, %s69
      %p71 = scmp.eq.s32.totalorder %s24, 0
      %p72 = por %p70, %p71
      %s74 = sadd.s32 %s73, 1
      %p77 = scmp.eq.s32.totalorder %s18, 1
      %p78 = scmp.ne.s32.totalorder %s73, %s75
      %p79 = scmp.eq.s32.totalorder %s18, 0
      %p80 = por %p78, %p79
      %p81 = scmp.ne.s32.totalorder %s73, %s75
      %p82 = scmp.eq.s32.totalorder %s23, 1
      %p83 = por %p81, %p82
      %p84 = scmp.ne.s32.totalorder %s75, %s76
      %p85 = scmp.eq.s32.totalorder %s23, 0
      %p86 = por %p84, %p85
      %p87 = scmp.ne.s32.totalorder %s75, %s76
      %p88 = scmp.eq.s32.totalorder %s24, 1
      %p89 = por %p87, %p88
      %p91 = scmp.ne.s32.totalorder %s76, %s90
      %p92 = scmp.eq.s32.totalorder %s24, 0
      %p93 = por %p91, %p92
      %s95 = sadd.s32 %s94, 1
      %p98 = scmp.eq.s32.totalorder %s18, 1
      %p99 = scmp.ne.s32.totalorder %s94, %s96
      %p100 = scmp.eq.s32.totalorder %s18, 0
      %p101 = por %p99, %p100
      %p102 = scmp.ne.s32.totalorder %s94, %s96
      %p103 = scmp.eq.s32.totalorder %s23, 1
      %p104 = por %p102, %p103
      %p105 = scmp.ne.s32.totalorder %s96, %s97
      %p106 = scmp.eq.s32.totalorder %s23, 0
      %p107 = por %p105, %p106
      %p108 = scmp.ne.s32.totalorder %s96, %s97
      %p109 = scmp.eq.s32.totalorder %s24, 1
      %p110 = por %p108, %p109
      %p112 = scmp.ne.s32.totalorder %s97, %s111
      %p113 = scmp.eq.s32.totalorder %s24, 0
      %p114 = por %p112, %p113
      %s116 = sadd.s32 %s115, 1
      %p119 = scmp.eq.s32.totalorder %s18, 1
      %p120 = scmp.ne.s32.totalorder %s115, %s117
      %p121 = scmp.eq.s32.totalorder %s18, 0
      %p122 = por %p120, %p121
      %p123 = scmp.ne.s32.totalorder %s115, %s117
      %p124 = scmp.eq.s32.totalorder %s23, 1
      %p125 = por %p123, %p124
      %p126 = scmp.ne.s32.totalorder %s117, %s118
      %p127 = scmp.eq.s32.totalorder %s23, 0
      %p128 = por %p126, %p127
      %p129 = scmp.ne.s32.totalorder %s117, %s118
      %p130 = scmp.eq.s32.totalorder %s24, 1
      %p131 = por %p129, %p130
      %p133 = scmp.ne.s32.totalorder %s118, %s132
      %p134 = scmp.eq.s32.totalorder %s24, 0
      %p135 = por %p133, %p134
      %s136 = ssub.s32 %s18, %s25
      %p137 = scmp.eq.s32.totalorder %s136, 0
      %s139 = sadd.s32 %s138, 1
      %s140 = scalar_select %p137, %s138, %s139
      %p143 = pneg %p137
      %p144 = scmp.eq.s32.totalorder %s18, 1
      %p145 = por %p143, %p144
      %p146 = scmp.ne.s32.totalorder %s138, %s141
      %p147 = scmp.eq.s32.totalorder %s18, 0
      %p148 = por %p146, %p147
      %p149 = scmp.ne.s32.totalorder %s138, %s141
      %p150 = scmp.eq.s32.totalorder %s23, 1
      %p151 = por %p149, %p150
      %p152 = scmp.ne.s32.totalorder %s141, %s142
      %p153 = scmp.eq.s32.totalorder %s23, 0
      %p154 = por %p152, %p153
      %p155 = scmp.ne.s32.totalorder %s141, %s142
      %p156 = scmp.eq.s32.totalorder %s24, 1
      %p157 = por %p155, %p156
      %p159 = scmp.ne.s32.totalorder %s142, %s158
      %p160 = scmp.eq.s32.totalorder %s24, 0
      %p161 = por %p159, %p160
      %p162 = scmp.le.s32.totalorder 1, %s18
      %p163 = scmp.lt.s32.totalorder %s18, 3
      %p164 = pnand %p162, %p163
      %p165 = pneg %p164
      // Predicated region
      $region9: #{tpu_custom_call.1} parent=5 // pred_check
        _
      $region10: #{tpu_custom_call.1} parent=5 // pred_check_branch
        %167 = sbr.rel (%p164) target = $region12
      $region11: #{tpu_custom_call.1} parent=5 // pred_region
        %s168 = ssub.s32 %s18, 1
        // Predicated region
        $region13: #{tpu_custom_call.1} parent=11 // pred_check
          %p169 = pneg %p65
        $region14: #{tpu_custom_call.1} parent=11 // pred_check_branch
          %171 = sbr.rel (%p169) target = $region16
        $region15: #{tpu_custom_call.1} parent=11 // pred_region
          %s173 = ssub.s32 64, 64
          %174 = vsyncadd [#allocation6], %s173
          %s176 = sshll.u32 [#allocation5], 4
          %s177 = int_to_ptr.vmem [resolvable:$true] %s176
          %179 = dma.hbm_to_vmem [thread:$0]  %s1, 64, %s177, [#allocation6]
        $region16: #{tpu_custom_call.1} parent=11 // pred_fallthru
          _
        // Predicated region
        $region17: #{tpu_custom_call.1} parent=11 // pred_check
          %p180 = pneg %p86
        $region18: #{tpu_custom_call.1} parent=11 // pred_check_branch
          %182 = sbr.rel (%p180) target = $region20
        $region19: #{tpu_custom_call.1} parent=11 // pred_region
          _
        $region20: #{tpu_custom_call.1} parent=11 // pred_fallthru
          _
        // Predicated region
        $region21: #{tpu_custom_call.1} parent=11 // pred_check
          %p183 = pneg %p107
        $region22: #{tpu_custom_call.1} parent=11 // pred_check_branch
          %185 = sbr.rel (%p183) target = $region24
        $region23: #{tpu_custom_call.1} parent=11 // pred_region
          _
        $region24: #{tpu_custom_call.1} parent=11 // pred_fallthru
          _
        // Predicated region
        $region25: #{tpu_custom_call.1} parent=11 // pred_check
          %p186 = pneg %p128
        $region26: #{tpu_custom_call.1} parent=11 // pred_check_branch
          %188 = sbr.rel (%p186) target = $region28
        $region27: #{tpu_custom_call.1} parent=11 // pred_region
          _
        $region28: #{tpu_custom_call.1} parent=11 // pred_fallthru
          _
      $region12: #{tpu_custom_call.1} parent=5 // pred_fallthru
        _
      %p189 = scmp.lt.s32.totalorder %s18, 2
      // Predicated region
      $region29: #{tpu_custom_call.1} parent=5 // pred_check
        %p190 = pneg %p189
      $region30: #{tpu_custom_call.1} parent=5 // pred_check_branch
        %192 = sbr.rel (%p190) target = $region32
      $region31: #{tpu_custom_call.1} parent=5 // pred_region
        // Predicated region
        $region33: #{tpu_custom_call.1} parent=31 // pred_check
          %p193 = pneg %p38
        $region34: #{tpu_custom_call.1} parent=31 // pred_check_branch
          %195 = sbr.rel (%p193) target = $region36
        $region35: #{tpu_custom_call.1} parent=31 // pred_region
          %s196 = sand.u32 %s28, 1
          %s197 = scalar_lea.sflag [#allocation3], %s196
          %s198 = sand.u32 %s28, 1
          %s199 = smul.addr %s198, 128
          %s200 = scalar_lea.vmem [#allocation2], %s199
          %s202 = ssub.s32 2048, 2048
          %203 = vsyncadd %s197, %s202
          %s204 = smul.addr %s18, 16
          %s205 = smul.addr %s204, 128
          %s206 = scalar_lea.hbm %s0, %s205
          %s207 = sshll.u32 %s200, 4
          %s208 = int_to_ptr.vmem [resolvable:$true] %s207
          %213 = dma.hbm_to_vmem [thread:$0]  %s206, 2048, %s208, %s197, 256, 256, 16
        $region36: #{tpu_custom_call.1} parent=31 // pred_fallthru
          _
      $region32: #{tpu_custom_call.1} parent=5 // pred_fallthru
        _
      %p214 = scmp.le.s32.totalorder 1, %s18
      %p215 = scmp.lt.s32.totalorder %s18, 3
      %p216 = pnand %p214, %p215
      %p217 = pneg %p216
      // Predicated region
      $region37: #{tpu_custom_call.1} parent=5 // pred_check
        _
      $region38: #{tpu_custom_call.1} parent=5 // pred_check_branch
        %219 = sbr.rel (%p216) target = $region40
      $region39: #{tpu_custom_call.1} parent=5 // pred_region
        %s220 = ssub.s32 %s18, 1
        %s221 = sand.u32 %s31, 1
        %s222 = scalar_lea.sflag [#allocation3], %s221
        %s223 = sand.u32 %s31, 1
        %s224 = smul.addr %s223, 128
        %s225 = scalar_lea.vmem [#allocation2], %s224
        // Predicated region
        $region41: #{tpu_custom_call.1} parent=39 // pred_check
          %p226 = pneg %p44
        $region42: #{tpu_custom_call.1} parent=39 // pred_check_branch
          %228 = sbr.rel (%p226) target = $region44
        $region43: #{tpu_custom_call.1} parent=39 // pred_region
          %229 = dma.done %s222, 2048
        $region44: #{tpu_custom_call.1} parent=39 // pred_fallthru
          _
        // Predicated region
        $region45: #{tpu_custom_call.1} parent=39 // pred_check
          %p230 = pneg %p65
        $region46: #{tpu_custom_call.1} parent=39 // pred_check_branch
          %232 = sbr.rel (%p230) target = $region48
        $region47: #{tpu_custom_call.1} parent=39 // pred_region
          %233 = dma.done [#allocation6], 64
        $region48: #{tpu_custom_call.1} parent=39 // pred_fallthru
          _
        %s234 = sand.u32 %s31, 1
        %s235 = scalar_lea.sflag [#allocation3], %s234
        %s236 = sand.u32 %s31, 1
        %s237 = smul.addr %s236, 128
        %s238 = scalar_lea.vmem [#allocation2], %s237
        %p239 = pneg %p44
        %p240 = pneg %p41
        %p241 = pneg %p65
        %p242 = pneg %p62
        %p243 = pneg %p86
        %p244 = pneg %p83
        %p245 = pneg %p107
        %p246 = pneg %p104
        %p247 = pneg %p128
        %p248 = pneg %p125
        %p249 = pneg %p154
        %p250 = pneg %p151
        %s251 = sand.u32 %s141, 1
        %s252 = scalar_lea.sflag [#allocation4], %s251
        %s253 = sand.u32 %s141, 1
        %s254 = smul.addr %s253, 128
        %s255 = scalar_lea.vmem [#allocation7], %s254
        %v256 = vld [vmem:[%s225] sm:$0xff]
        %v257 = vld [vmem:[%s225 + $0x8] sm:$0xff]
        %v258 = vld [vmem:[%s225 + $0x10] sm:$0xff]
        %v259 = vld [vmem:[%s225 + $0x18] sm:$0xff]
        %v260 = vld [vmem:[%s225 + $0x20] sm:$0xff]
        %v261 = vld [vmem:[%s225 + $0x28] sm:$0xff]
        %v262 = vld [vmem:[%s225 + $0x30] sm:$0xff]
        %v263 = vld [vmem:[%s225 + $0x38] sm:$0xff]
        %v264 = vld [vmem:[%s225 + $0x40] sm:$0xff]
        %v265 = vld [vmem:[%s225 + $0x48] sm:$0xff]
        %v266 = vld [vmem:[%s225 + $0x50] sm:$0xff]
        %v267 = vld [vmem:[%s225 + $0x58] sm:$0xff]
        %v268 = vld [vmem:[%s225 + $0x60] sm:$0xff]
        %v269 = vld [vmem:[%s225 + $0x68] sm:$0xff]
        %v270 = vld [vmem:[%s225 + $0x70] sm:$0xff]
        %v271 = vld [vmem:[%s225 + $0x78] sm:$0xff]
        %v272 = vadd.f32 %v256, %v257
        %273 = vadd.xlane.f32.xlu0 %v272
        %v274 = vpop.xlane.xlu0 %273
        %v275 = vadd.f32 %v258, %v259
        %276 = vadd.xlane.f32.xlu0 %v275
        %v277 = vpop.xlane.xlu0 %276
        %v278 = vadd.f32 %v260, %v261
        %279 = vadd.xlane.f32.xlu0 %v278
        %v280 = vpop.xlane.xlu0 %279
        %v281 = vadd.f32 %v262, %v263
        %282 = vadd.xlane.f32.xlu0 %v281
        %v283 = vpop.xlane.xlu0 %282
        %v284 = vadd.f32 %v264, %v265
        %285 = vadd.xlane.f32.xlu0 %v284
        %v286 = vpop.xlane.xlu0 %285
        %v287 = vadd.f32 %v266, %v267
        %288 = vadd.xlane.f32.xlu0 %v287
        %v289 = vpop.xlane.xlu0 %288
        %v290 = vadd.f32 %v268, %v269
        %291 = vadd.xlane.f32.xlu0 %v290
        %v292 = vpop.xlane.xlu0 %291
        %v293 = vadd.f32 %v270, %v271
        %294 = vadd.xlane.f32.xlu0 %v293
        %v295 = vpop.xlane.xlu0 %294
        %v296 = vmul.f32 %v274, 0.00390625
        %v297 = vmul.f32 %v277, 0.00390625
        %v298 = vmul.f32 %v280, 0.00390625
        %v299 = vmul.f32 %v283, 0.00390625
        %v300 = vmul.f32 %v286, 0.00390625
        %v301 = vmul.f32 %v289, 0.00390625
        %v302 = vmul.f32 %v292, 0.00390625
        %v303 = vmul.f32 %v295, 0.00390625
        %v304 = vld [vmem:[#allocation5] sm:$0xf]
        %v306 = vlaneseq
        %v307 = vshrl.u32 %v306, 7
        %v308 = vsub.s32 0, %v307
        %v309 = vrot.slane %v304, %v308
        %311 = vbcast.lane.b32.xlu0 %v309, 256
        %v312 = vpop.permute.xlu0 %311
        %s314 = sor.u32 256, 8
        %315 = vbcast.lane.b32.xlu0 %v309, %s314
        %v316 = vpop.permute.xlu0 %315
        %s318 = sor.u32 256, 16
        %319 = vbcast.lane.b32.xlu0 %v309, %s318
        %v320 = vpop.permute.xlu0 %319
        %s322 = sor.u32 256, 24
        %323 = vbcast.lane.b32.xlu0 %v309, %s322
        %v324 = vpop.permute.xlu0 %323
        %s326 = sor.u32 256, 32
        %327 = vbcast.lane.b32.xlu0 %v309, %s326
        %v328 = vpop.permute.xlu0 %327
        %s330 = sor.u32 256, 40
        %331 = vbcast.lane.b32.xlu0 %v309, %s330
        %v332 = vpop.permute.xlu0 %331
        %s334 = sor.u32 256, 48
        %335 = vbcast.lane.b32.xlu0 %v309, %s334
        %v336 = vpop.permute.xlu0 %335
        %s338 = sor.u32 256, 56
        %339 = vbcast.lane.b32.xlu0 %v309, %s338
        %v340 = vpop.permute.xlu0 %339
        %v341 = vlaneseq
        %v342 = vshrl.u32 %v341, 7
        %v343 = vsub.s32 1, %v342
        %v344 = vrot.slane %v304, %v343
        %346 = vbcast.lane.b32.xlu0 %v344, 256
        %v347 = vpop.permute.xlu0 %346
        %s349 = sor.u32 256, 8
        %350 = vbcast.lane.b32.xlu0 %v344, %s349
        %v351 = vpop.permute.xlu0 %350
        %s353 = sor.u32 256, 16
        %354 = vbcast.lane.b32.xlu0 %v344, %s353
        %v355 = vpop.permute.xlu0 %354
        %s357 = sor.u32 256, 24
        %358 = vbcast.lane.b32.xlu0 %v344, %s357
        %v359 = vpop.permute.xlu0 %358
        %s361 = sor.u32 256, 32
        %362 = vbcast.lane.b32.xlu0 %v344, %s361
        %v363 = vpop.permute.xlu0 %362
        %s365 = sor.u32 256, 40
        %366 = vbcast.lane.b32.xlu0 %v344, %s365
        %v367 = vpop.permute.xlu0 %366
        %s369 = sor.u32 256, 48
        %370 = vbcast.lane.b32.xlu0 %v344, %s369
        %v371 = vpop.permute.xlu0 %370
        %s373 = sor.u32 256, 56
        %374 = vbcast.lane.b32.xlu0 %v344, %s373
        %v375 = vpop.permute.xlu0 %374
        %v376 = vlaneseq
        %v377 = vshrl.u32 %v376, 7
        %v378 = vsub.s32 2, %v377
        %v379 = vrot.slane %v304, %v378
        %381 = vbcast.lane.b32.xlu0 %v379, 256
        %v382 = vpop.permute.xlu0 %381
        %s384 = sor.u32 256, 8
        %385 = vbcast.lane.b32.xlu0 %v379, %s384
        %v386 = vpop.permute.xlu0 %385
        %s388 = sor.u32 256, 16
        %389 = vbcast.lane.b32.xlu0 %v379, %s388
        %v390 = vpop.permute.xlu0 %389
        %s392 = sor.u32 256, 24
        %393 = vbcast.lane.b32.xlu0 %v379, %s392
        %v394 = vpop.permute.xlu0 %393
        %s396 = sor.u32 256, 32
        %397 = vbcast.lane.b32.xlu0 %v379, %s396
        %v398 = vpop.permute.xlu0 %397
        %s400 = sor.u32 256, 40
        %401 = vbcast.lane.b32.xlu0 %v379, %s400
        %v402 = vpop.permute.xlu0 %401
        %s404 = sor.u32 256, 48
        %405 = vbcast.lane.b32.xlu0 %v379, %s404
        %v406 = vpop.permute.xlu0 %405
        %s408 = sor.u32 256, 56
        %409 = vbcast.lane.b32.xlu0 %v379, %s408
        %v410 = vpop.permute.xlu0 %409
        %v411 = vlaneseq
        %v412 = vshrl.u32 %v411, 7
        %v413 = vsub.s32 3, %v412
        %v414 = vrot.slane %v304, %v413
        %416 = vbcast.lane.b32.xlu0 %v414, 256
        %v417 = vpop.permute.xlu0 %416
        %s419 = sor.u32 256, 8
        %420 = vbcast.lane.b32.xlu0 %v414, %s419
        %v421 = vpop.permute.xlu0 %420
        %s423 = sor.u32 256, 16
        %424 = vbcast.lane.b32.xlu0 %v414, %s423
        %v425 = vpop.permute.xlu0 %424
        %s427 = sor.u32 256, 24
        %428 = vbcast.lane.b32.xlu0 %v414, %s427
        %v429 = vpop.permute.xlu0 %428
        %s431 = sor.u32 256, 32
        %432 = vbcast.lane.b32.xlu0 %v414, %s431
        %v433 = vpop.permute.xlu0 %432
        %s435 = sor.u32 256, 40
        %436 = vbcast.lane.b32.xlu0 %v414, %s435
        %v437 = vpop.permute.xlu0 %436
        %s439 = sor.u32 256, 48
        %440 = vbcast.lane.b32.xlu0 %v414, %s439
        %v441 = vpop.permute.xlu0 %440
        %s443 = sor.u32 256, 56
        %444 = vbcast.lane.b32.xlu0 %v414, %s443
        %v445 = vpop.permute.xlu0 %444
        %v478 = vmul.f32 %v296, %v312
        %v479 = vmul.f32 %v297, %v316
        %v480 = vmul.f32 %v298, %v320
        %v481 = vmul.f32 %v299, %v324
        %v482 = vmul.f32 %v300, %v328
        %v483 = vmul.f32 %v301, %v332
        %v484 = vmul.f32 %v302, %v336
        %v485 = vmul.f32 %v303, %v340
        %v486 = vmul.f32 %v296, %v347
        %v487 = vmul.f32 %v297, %v351
        %v488 = vmul.f32 %v298, %v355
        %v489 = vmul.f32 %v299, %v359
        %v490 = vmul.f32 %v300, %v363
        %v491 = vmul.f32 %v301, %v367
        %v492 = vmul.f32 %v302, %v371
        %v493 = vmul.f32 %v303, %v375
        %v494 = vmul.f32 %v296, %v382
        %v495 = vmul.f32 %v297, %v386
        %v496 = vmul.f32 %v298, %v390
        %v497 = vmul.f32 %v299, %v394
        %v498 = vmul.f32 %v300, %v398
        %v499 = vmul.f32 %v301, %v402
        %v500 = vmul.f32 %v302, %v406
        %v501 = vmul.f32 %v303, %v410
        %v502 = vmul.f32 %v296, %v417
        %v503 = vmul.f32 %v297, %v421
        %v504 = vmul.f32 %v298, %v425
        %v505 = vmul.f32 %v299, %v429
        %v506 = vmul.f32 %v300, %v433
        %v507 = vmul.f32 %v301, %v437
        %v508 = vmul.f32 %v302, %v441
        %v509 = vmul.f32 %v303, %v445
        %542 = vset.pattern.permute.xlu0 0
        %543 = vperm.xlu0 %542, %v478
        %v544 = vpop.permute.xlu0 %543
        %545 = vset.pattern.permute.xlu0 0
        %546 = vperm.xlu0 %545, %v479
        %v547 = vpop.permute.xlu0 %546
        %548 = vset.pattern.permute.xlu0 0
        %549 = vperm.xlu0 %548, %v480
        %v550 = vpop.permute.xlu0 %549
        %551 = vset.pattern.permute.xlu0 0
        %552 = vperm.xlu0 %551, %v481
        %v553 = vpop.permute.xlu0 %552
        %554 = vset.pattern.permute.xlu0 0
        %555 = vperm.xlu0 %554, %v482
        %v556 = vpop.permute.xlu0 %555
        %557 = vset.pattern.permute.xlu0 0
        %558 = vperm.xlu0 %557, %v483
        %v559 = vpop.permute.xlu0 %558
        %560 = vset.pattern.permute.xlu0 0
        %561 = vperm.xlu0 %560, %v484
        %v562 = vpop.permute.xlu0 %561
        %563 = vset.pattern.permute.xlu0 0
        %564 = vperm.xlu0 %563, %v485
        %v565 = vpop.permute.xlu0 %564
        %566 = vset.pattern.permute.xlu0 0
        %567 = vperm.xlu0 %566, %v486
        %v568 = vpop.permute.xlu0 %567
        %569 = vset.pattern.permute.xlu0 0
        %570 = vperm.xlu0 %569, %v487
        %v571 = vpop.permute.xlu0 %570
        %572 = vset.pattern.permute.xlu0 0
        %573 = vperm.xlu0 %572, %v488
        %v574 = vpop.permute.xlu0 %573
        %575 = vset.pattern.permute.xlu0 0
        %576 = vperm.xlu0 %575, %v489
        %v577 = vpop.permute.xlu0 %576
        %578 = vset.pattern.permute.xlu0 0
        %579 = vperm.xlu0 %578, %v490
        %v580 = vpop.permute.xlu0 %579
        %581 = vset.pattern.permute.xlu0 0
        %582 = vperm.xlu0 %581, %v491
        %v583 = vpop.permute.xlu0 %582
        %584 = vset.pattern.permute.xlu0 0
        %585 = vperm.xlu0 %584, %v492
        %v586 = vpop.permute.xlu0 %585
        %587 = vset.pattern.permute.xlu0 0
        %588 = vperm.xlu0 %587, %v493
        %v589 = vpop.permute.xlu0 %588
        %590 = vset.pattern.permute.xlu0 0
        %591 = vperm.xlu0 %590, %v494
        %v592 = vpop.permute.xlu0 %591
        %593 = vset.pattern.permute.xlu0 0
        %594 = vperm.xlu0 %593, %v495
        %v595 = vpop.permute.xlu0 %594
        %596 = vset.pattern.permute.xlu0 0
        %597 = vperm.xlu0 %596, %v496
        %v598 = vpop.permute.xlu0 %597
        %599 = vset.pattern.permute.xlu0 0
        %600 = vperm.xlu0 %599, %v497
        %v601 = vpop.permute.xlu0 %600
        %602 = vset.pattern.permute.xlu0 0
        %603 = vperm.xlu0 %602, %v498
        %v604 = vpop.permute.xlu0 %603
        %605 = vset.pattern.permute.xlu0 0
        %606 = vperm.xlu0 %605, %v499
        %v607 = vpop.permute.xlu0 %606
        %608 = vset.pattern.permute.xlu0 0
        %609 = vperm.xlu0 %608, %v500
        %v610 = vpop.permute.xlu0 %609
        %611 = vset.pattern.permute.xlu0 0
        %612 = vperm.xlu0 %611, %v501
        %v613 = vpop.permute.xlu0 %612
        %614 = vset.pattern.permute.xlu0 0
        %615 = vperm.xlu0 %614, %v502
        %v616 = vpop.permute.xlu0 %615
        %617 = vset.pattern.permute.xlu0 0
        %618 = vperm.xlu0 %617, %v503
        %v619 = vpop.permute.xlu0 %618
        %620 = vset.pattern.permute.xlu0 0
        %621 = vperm.xlu0 %620, %v504
        %v622 = vpop.permute.xlu0 %621
        %623 = vset.pattern.permute.xlu0 0
        %624 = vperm.xlu0 %623, %v505
        %v625 = vpop.permute.xlu0 %624
        %626 = vset.pattern.permute.xlu0 0
        %627 = vperm.xlu0 %626, %v506
        %v628 = vpop.permute.xlu0 %627
        %629 = vset.pattern.permute.xlu0 0
        %630 = vperm.xlu0 %629, %v507
        %v631 = vpop.permute.xlu0 %630
        %632 = vset.pattern.permute.xlu0 0
        %633 = vperm.xlu0 %632, %v508
        %v634 = vpop.permute.xlu0 %633
        %635 = vset.pattern.permute.xlu0 0
        %636 = vperm.xlu0 %635, %v509
        %v637 = vpop.permute.xlu0 %636
        %v638 = vlaneseq
        %v639 = vand.u32 %v638, 127
        %v640 = vlaneseq
        %v641 = vshrl.u32 %v640, 7
        %v642 = vsub.s32 %v639, %v641
        %v643 = vrot.slane %v544, %v642
        %v644 = vadd.s32 %v639, 4294967288
        %v645 = vlaneseq
        %v646 = vshrl.u32 %v645, 7
        %v647 = vsub.s32 %v644, %v646
        %v648 = vrot.slane %v547, %v647
        %vm649 = vcmask 130112
        %v650 = vsel %vm649, %v648, %v643
        %v651 = vadd.s32 %v639, 4294967280
        %v652 = vlaneseq
        %v653 = vshrl.u32 %v652, 7
        %v654 = vsub.s32 %v651, %v653
        %v655 = vrot.slane %v550, %v654
        %vm656 = vcmask 195712
        %v657 = vsel %vm656, %v655, %v650
        %v658 = vadd.s32 %v639, 4294967272
        %v659 = vlaneseq
        %v660 = vshrl.u32 %v659, 7
        %v661 = vsub.s32 %v658, %v660
        %v662 = vrot.slane %v553, %v661
        %vm663 = vcmask 261312
        %v664 = vsel %vm663, %v662, %v657
        %v665 = vadd.s32 %v639, 4294967264
        %v666 = vlaneseq
        %v667 = vshrl.u32 %v666, 7
        %v668 = vsub.s32 %v665, %v667
        %v669 = vrot.slane %v556, %v668
        %vm670 = vcmask 326912
        %v671 = vsel %vm670, %v669, %v664
        %v672 = vadd.s32 %v639, 4294967256
        %v673 = vlaneseq
        %v674 = vshrl.u32 %v673, 7
        %v675 = vsub.s32 %v672, %v674
        %v676 = vrot.slane %v559, %v675
        %vm677 = vcmask 392512
        %v678 = vsel %vm677, %v676, %v671
        %v679 = vadd.s32 %v639, 4294967248
        %v680 = vlaneseq
        %v681 = vshrl.u32 %v680, 7
        %v682 = vsub.s32 %v679, %v681
        %v683 = vrot.slane %v562, %v682
        %vm684 = vcmask 458112
        %v685 = vsel %vm684, %v683, %v678
        %v686 = vadd.s32 %v639, 4294967240
        %v687 = vlaneseq
        %v688 = vshrl.u32 %v687, 7
        %v689 = vsub.s32 %v686, %v688
        %v690 = vrot.slane %v565, %v689
        %vm691 = vcmask 523712
        %v692 = vsel %vm691, %v690, %v685
        %v693 = vlaneseq
        %v694 = vshrl.u32 %v693, 7
        %v695 = vsub.s32 %v639, %v694
        %v696 = vrot.slane %v568, %v695
        %v697 = vlaneseq
        %v698 = vshrl.u32 %v697, 7
        %v699 = vsub.s32 %v644, %v698
        %v700 = vrot.slane %v571, %v699
        %v701 = vsel %vm649, %v700, %v696
        %v702 = vlaneseq
        %v703 = vshrl.u32 %v702, 7
        %v704 = vsub.s32 %v651, %v703
        %v705 = vrot.slane %v574, %v704
        %v706 = vsel %vm656, %v705, %v701
        %v707 = vlaneseq
        %v708 = vshrl.u32 %v707, 7
        %v709 = vsub.s32 %v658, %v708
        %v710 = vrot.slane %v577, %v709
        %v711 = vsel %vm663, %v710, %v706
        %v712 = vlaneseq
        %v713 = vshrl.u32 %v712, 7
        %v714 = vsub.s32 %v665, %v713
        %v715 = vrot.slane %v580, %v714
        %v716 = vsel %vm670, %v715, %v711
        %v717 = vlaneseq
        %v718 = vshrl.u32 %v717, 7
        %v719 = vsub.s32 %v672, %v718
        %v720 = vrot.slane %v583, %v719
        %v721 = vsel %vm677, %v720, %v716
        %v722 = vlaneseq
        %v723 = vshrl.u32 %v722, 7
        %v724 = vsub.s32 %v679, %v723
        %v725 = vrot.slane %v586, %v724
        %v726 = vsel %vm684, %v725, %v721
        %v727 = vlaneseq
        %v728 = vshrl.u32 %v727, 7
        %v729 = vsub.s32 %v686, %v728
        %v730 = vrot.slane %v589, %v729
        %v731 = vsel %vm691, %v730, %v726
        %v732 = vlaneseq
        %v733 = vshrl.u32 %v732, 7
        %v734 = vsub.s32 %v639, %v733
        %v735 = vrot.slane %v592, %v734
        %v736 = vlaneseq
        %v737 = vshrl.u32 %v736, 7
        %v738 = vsub.s32 %v644, %v737
        %v739 = vrot.slane %v595, %v738
        %v740 = vsel %vm649, %v739, %v735
        %v741 = vlaneseq
        %v742 = vshrl.u32 %v741, 7
        %v743 = vsub.s32 %v651, %v742
        %v744 = vrot.slane %v598, %v743
        %v745 = vsel %vm656, %v744, %v740
        %v746 = vlaneseq
        %v747 = vshrl.u32 %v746, 7
        %v748 = vsub.s32 %v658, %v747
        %v749 = vrot.slane %v601, %v748
        %v750 = vsel %vm663, %v749, %v745
        %v751 = vlaneseq
        %v752 = vshrl.u32 %v751, 7
        %v753 = vsub.s32 %v665, %v752
        %v754 = vrot.slane %v604, %v753
        %v755 = vsel %vm670, %v754, %v750
        %v756 = vlaneseq
        %v757 = vshrl.u32 %v756, 7
        %v758 = vsub.s32 %v672, %v757
        %v759 = vrot.slane %v607, %v758
        %v760 = vsel %vm677, %v759, %v755
        %v761 = vlaneseq
        %v762 = vshrl.u32 %v761, 7
        %v763 = vsub.s32 %v679, %v762
        %v764 = vrot.slane %v610, %v763
        %v765 = vsel %vm684, %v764, %v760
        %v766 = vlaneseq
        %v767 = vshrl.u32 %v766, 7
        %v768 = vsub.s32 %v686, %v767
        %v769 = vrot.slane %v613, %v768
        %v770 = vsel %vm691, %v769, %v765
        %v771 = vlaneseq
        %v772 = vshrl.u32 %v771, 7
        %v773 = vsub.s32 %v639, %v772
        %v774 = vrot.slane %v616, %v773
        %v775 = vlaneseq
        %v776 = vshrl.u32 %v775, 7
        %v777 = vsub.s32 %v644, %v776
        %v778 = vrot.slane %v619, %v777
        %v779 = vsel %vm649, %v778, %v774
        %v780 = vlaneseq
        %v781 = vshrl.u32 %v780, 7
        %v782 = vsub.s32 %v651, %v781
        %v783 = vrot.slane %v622, %v782
        %v784 = vsel %vm656, %v783, %v779
        %v785 = vlaneseq
        %v786 = vshrl.u32 %v785, 7
        %v787 = vsub.s32 %v658, %v786
        %v788 = vrot.slane %v625, %v787
        %v789 = vsel %vm663, %v788, %v784
        %v790 = vlaneseq
        %v791 = vshrl.u32 %v790, 7
        %v792 = vsub.s32 %v665, %v791
        %v793 = vrot.slane %v628, %v792
        %v794 = vsel %vm670, %v793, %v789
        %v795 = vlaneseq
        %v796 = vshrl.u32 %v795, 7
        %v797 = vsub.s32 %v672, %v796
        %v798 = vrot.slane %v631, %v797
        %v799 = vsel %vm677, %v798, %v794
        %v800 = vlaneseq
        %v801 = vshrl.u32 %v800, 7
        %v802 = vsub.s32 %v679, %v801
        %v803 = vrot.slane %v634, %v802
        %v804 = vsel %vm684, %v803, %v799
        %v805 = vlaneseq
        %v806 = vshrl.u32 %v805, 7
        %v807 = vsub.s32 %v686, %v806
        %v808 = vrot.slane %v637, %v807
        %v809 = vsel %vm691, %v808, %v804
        %vm810 = vcmask 1041409
        %v811 = vsel %vm810, %v731, %v692
        %vm812 = vcmask 1042434
        %v813 = vsel %vm812, %v770, %v811
        %vm814 = vcmask 1043459
        %v815 = vsel %vm814, %v809, %v813
        %vm817 = vcmask 519168
        %v818 = vsel %vm817, %v815, 0.0
        %819 = vadd.xlane.f32.xlu0 %v818
        %v820 = vpop.xlane.xlu0 %819
        %v821 = vld [vmem:[%s2] sm:$0x1]
        %v823 = vlaneseq
        %v824 = vshrl.u32 %v823, 7
        %v825 = vsub.s32 0, %v824
        %v826 = vrot.slane %v821, %v825
        %828 = vbcast.lane.b32.xlu0 %v826, 256
        %v829 = vpop.permute.xlu0 %828
        %v831 = vadd.f32 %v820, %v829
        %v832 = vmax.f32 %v831, 0.0
        %v833 = vld [vmem:[%s3] sm:$0xf]
        %835 = vset.pattern.permute.xlu0 0
        %836 = vperm.xlu0 %835, %v832
        %v837 = vpop.permute.xlu0 %836
        %v839 = vmul.f32 %v837, %v833
        %v840 = vsel %vm817, %v839, 0.0
        %v841 = vrot.slane %v840, 4
        %v842 = vadd.f32 %v840, %v841
        %v843 = vrot.slane %v842, 2
        %v844 = vadd.f32 %v842, %v843
        %v845 = vrot.slane %v844, 1
        %v846 = vadd.f32 %v844, %v845
        %v847 = vld [vmem:[%s4] sm:$0x1]
        %v848 = vadd.f32 %v846, %v847
        %v849 = vxor.u32 %v848, 2147483648
        %v850 = vmul.f32 %v849, 1.442695
        %v851 = vpow.pop %v850
        %v852 = vadd.f32 %v851, 1.0
        %v853 = vrcp.pop %v852
        %v854 = vmul.f32 1.0, %v853
        %v855 = vlaneseq
        %v856 = vshrl.u32 %v855, 7
        %v857 = vsub.s32 0, %v856
        %v858 = vrot.slane %v854, %v857
        %860 = vbcast.lane.b32.xlu0 %v858, 256
        %v861 = vpop.permute.xlu0 %860
        %s863 = sor.u32 256, 8
        %864 = vbcast.lane.b32.xlu0 %v858, %s863
        %v865 = vpop.permute.xlu0 %864
        %s867 = sor.u32 256, 16
        %868 = vbcast.lane.b32.xlu0 %v858, %s867
        %v869 = vpop.permute.xlu0 %868
        %s871 = sor.u32 256, 24
        %872 = vbcast.lane.b32.xlu0 %v858, %s871
        %v873 = vpop.permute.xlu0 %872
        %s875 = sor.u32 256, 32
        %876 = vbcast.lane.b32.xlu0 %v858, %s875
        %v877 = vpop.permute.xlu0 %876
        %s879 = sor.u32 256, 40
        %880 = vbcast.lane.b32.xlu0 %v858, %s879
        %v881 = vpop.permute.xlu0 %880
        %s883 = sor.u32 256, 48
        %884 = vbcast.lane.b32.xlu0 %v858, %s883
        %v885 = vpop.permute.xlu0 %884
        %s887 = sor.u32 256, 56
        %888 = vbcast.lane.b32.xlu0 %v858, %s887
        %v889 = vpop.permute.xlu0 %888
        %v890 = vmul.f32 %v256, %v861
        %v891 = vmul.f32 %v257, %v861
        %v892 = vmul.f32 %v258, %v865
        %v893 = vmul.f32 %v259, %v865
        %v894 = vmul.f32 %v260, %v869
        %v895 = vmul.f32 %v261, %v869
        %v896 = vmul.f32 %v262, %v873
        %v897 = vmul.f32 %v263, %v873
        %v898 = vmul.f32 %v264, %v877
        %v899 = vmul.f32 %v265, %v877
        %v900 = vmul.f32 %v266, %v881
        %v901 = vmul.f32 %v267, %v881
        %v902 = vmul.f32 %v268, %v885
        %v903 = vmul.f32 %v269, %v885
        %v904 = vmul.f32 %v270, %v889
        %v905 = vmul.f32 %v271, %v889
        %906 = vst [vmem:[%s255] sm:$0xff] %v890
        %907 = vst [vmem:[%s255 + $0x8] sm:$0xff] %v891
        %908 = vst [vmem:[%s255 + $0x10] sm:$0xff] %v892
        %909 = vst [vmem:[%s255 + $0x18] sm:$0xff] %v893
        %910 = vst [vmem:[%s255 + $0x20] sm:$0xff] %v894
        %911 = vst [vmem:[%s255 + $0x28] sm:$0xff] %v895
        %912 = vst [vmem:[%s255 + $0x30] sm:$0xff] %v896
        %913 = vst [vmem:[%s255 + $0x38] sm:$0xff] %v897
        %914 = vst [vmem:[%s255 + $0x40] sm:$0xff] %v898
        %915 = vst [vmem:[%s255 + $0x48] sm:$0xff] %v899
        %916 = vst [vmem:[%s255 + $0x50] sm:$0xff] %v900
        %917 = vst [vmem:[%s255 + $0x58] sm:$0xff] %v901
        %918 = vst [vmem:[%s255 + $0x60] sm:$0xff] %v902
        %919 = vst [vmem:[%s255 + $0x68] sm:$0xff] %v903
        %920 = vst [vmem:[%s255 + $0x70] sm:$0xff] %v904
        %921 = vst [vmem:[%s255 + $0x78] sm:$0xff] %v905
        %s922 = sand.u32 %s141, 1
        %s923 = scalar_lea.sflag [#allocation4], %s922
        %s924 = sand.u32 %s141, 1
        %s925 = smul.addr %s924, 128
        %s926 = scalar_lea.vmem [#allocation7], %s925
        // Predicated region
        $region49: #{tpu_custom_call.1} parent=39 // pred_check
          %p927 = pneg %p151
        $region50: #{tpu_custom_call.1} parent=39 // pred_check_branch
          %929 = sbr.rel (%p927) target = $region52
        $region51: #{tpu_custom_call.1} parent=39 // pred_region
          %s931 = ssub.s32 2048, 2048
          %932 = vsyncadd %s923, %s931
          %s933 = smul.addr %s23, 16
          %s934 = smul.addr %s933, 128
          %s935 = scalar_lea.hbm %s5, %s934
          %s936 = sshll.u32 %s926, 4
          %s937 = int_to_ptr.vmem [resolvable:$true] %s936
          %942 = dma.vmem_to_hbm [thread:$0]  %s937, 2048, %s935, %s923, 256, 256, 16
        $region52: #{tpu_custom_call.1} parent=39 // pred_fallthru
          _
      $region40: #{tpu_custom_call.1} parent=5 // pred_fallthru
        _
      %p943 = scmp.le.s32.totalorder 2, %s18
      // Predicated region
      $region53: #{tpu_custom_call.1} parent=5 // pred_check
        %p944 = pneg %p943
      $region54: #{tpu_custom_call.1} parent=5 // pred_check_branch
        %946 = sbr.rel (%p944) target = $region56
      $region55: #{tpu_custom_call.1} parent=5 // pred_region
        %s947 = ssub.s32 %s18, 2
        // Predicated region
        $region57: #{tpu_custom_call.1} parent=55 // pred_check
          %p948 = pneg %p157
        $region58: #{tpu_custom_call.1} parent=55 // pred_check_branch
          %950 = sbr.rel (%p948) target = $region60
        $region59: #{tpu_custom_call.1} parent=55 // pred_region
          %s951 = sand.u32 %s142, 1
          %s952 = scalar_lea.sflag [#allocation4], %s951
          %s953 = sand.u32 %s142, 1
          %s954 = smul.addr %s953, 128
          %s955 = scalar_lea.vmem [#allocation7], %s954
          %956 = dma.done %s952, 2048
        $region60: #{tpu_custom_call.1} parent=55 // pred_fallthru
          _
      $region56: #{tpu_custom_call.1} parent=5 // pred_fallthru
        _
    $region6: #{tpu_custom_call.1} parent=1 // loop_footer
      %s22 = sadd.s32 1, %s18
    $region7: #{tpu_custom_call.1} parent=1 // loop_footer_branch
      %17 = sbr.rel target = $region3
    $region8: #{tpu_custom_call.1} parent=1 // loop_exit
      _
    %957 = vsyncpa [#allocation3], 1
    %s958 = scalar_lea.sflag [#allocation3], 1
    %959 = vsyncpa %s958, 1
    %960 = vsyncpa [#allocation6], 1
    %961 = vsyncpa [#allocation4], 1
    %s962 = scalar_lea.sflag [#allocation4], 1
    %963 = vsyncpa %s962, 1

</llo_original>
